<compile_context>
chip_gen: v7x
topology: tpu7x:2x2x1
jax: 0.10.0
libtpu: 0.0.40
codegen_flags: <defaults>
</compile_context>

<pallas_src>
import functools

import jax
import jax.numpy as jnp
from jax.experimental import pallas as pl
from jax.experimental.pallas import tpu as pltpu


def _round_up(x, m):
    return ((x + m - 1) // m) * m


def _vmem_capacity_bytes():
    """Generation-aware VMEM capacity (v5e/v6e: 128 MiB, v7x: 64 MiB per TC)."""
    try:
        return int(pltpu.get_tpu_info().vmem_capacity_bytes)
    except Exception:
        return 64 << 20   # conservative fallback fits every generation


def _vmem_limit(need, cap):
    """Always set an explicit scoped-VMEM limit (+margin), capped below physical."""
    return int(min(cap - (2 << 20), max(int(need * 1.25) + (4 << 20), 16 << 20)))


def _apply_max_norm(result, max_norm, norm_type):
    """Row-wise renorm: rows whose p-norm exceeds max_norm are divided by their norm.

    p=2 compares squared norms (no per-row sqrt); the scale goes through
    rsqrt/reciprocal on the EUP. NaN-safe for all-zero rows.
    """
    if max_norm is None:
        return result
    if norm_type == 2.0:
        sq = jnp.sum(result * result, axis=-1, keepdims=True)
        over = sq > (max_norm * max_norm)
        inv = jax.lax.rsqrt(jnp.where(sq > 0.0, sq, 1.0))
        scale = jnp.where(over, inv, 1.0)
    else:
        norm = jnp.power(
            jnp.sum(jnp.power(jnp.abs(result), norm_type), axis=-1, keepdims=True),
            1.0 / norm_type,
        )
        inv = pl.reciprocal(jnp.where(norm > 0.0, norm, 1.0), approx=True)
        scale = jnp.where(norm > max_norm, inv, 1.0)
    return result * scale


# ---------------------------------------------------------------------------
# Path 1: one-hot input  ->  K-tiled MXU matmul with f32 accumulator.
# ---------------------------------------------------------------------------
def _matmul_kernel(oh_ref, w_ref, out_ref, acc_ref, *, max_norm, norm_type):
    k = pl.program_id(1)

    @pl.when(k == 0)
    def _init():
        acc_ref[...] = jnp.zeros_like(acc_ref)

    a = oh_ref[...]
    w = w_ref[...]
    if a.dtype != w.dtype:
        a = a.astype(w.dtype)   # bf16 one-hot entries are exact 0/1 -> lossless cast
    acc_ref[...] += jnp.dot(a, w, preferred_element_type=jnp.float32)

    @pl.when(k == pl.num_programs(1) - 1)
    def _finalize():
        result = _apply_max_norm(acc_ref[...], max_norm, norm_type)
        out_ref[...] = result.astype(out_ref.dtype)


def _matmul_kernel_single_k(oh_ref, w_ref, out_ref, *, max_norm, norm_type):
    # No reduction over K: write straight to out_ref, no accumulator round-trip.
    a = oh_ref[...]
    w = w_ref[...]
    if a.dtype != w.dtype:
        a = a.astype(w.dtype)
    result = jnp.dot(a, w, preferred_element_type=jnp.float32)
    out_ref[...] = _apply_max_norm(result, max_norm, norm_type).astype(out_ref.dtype)


def _one_hot_matmul(one_hot_flat, weight, max_norm, norm_type, tm):
    M, depth = one_hot_flat.shape
    depth_w, emsize = weight.shape
    assert depth == depth_w

    oh_item = jnp.dtype(one_hot_flat.dtype).itemsize
    w_item = jnp.dtype(weight.dtype).itemsize
    out_item = 4

    # --- depth (vocab / reduction) padding & K tile ------------------------
    # Real vocab sizes (50257, 32000, ...) are rarely 128-aligned; pad with
    # zero one-hot columns / zero weight rows so we never fall back to holding
    # the full weight (double-buffered) in VMEM.
    if depth % 128 != 0:
        unit = 512 if depth >= 2048 else 128
        depth_pad = _round_up(depth, unit)
        one_hot_flat = jnp.pad(one_hot_flat, ((0, 0), (0, depth_pad - depth)))
        weight = jnp.pad(weight, ((0, depth_pad - depth), (0, 0)))
    else:
        depth_pad = depth
    tk = 128
    for cand in (512, 256):
        if depth_pad % cand == 0:
            tk = cand
            break

    # --- row tile (large default amortises the per-row-tile weight re-fetch) --
    tm_eff = _round_up(min(tm, _round_up(M, 8)), 8)

    # --- fit tiles into this generation's VMEM ------------------------------
    vmem_cap = _vmem_capacity_bytes()
    budget = vmem_cap - (8 << 20)           # headroom for compiler internals

    def vmem_need(tm_, tk_):
        return (2 * tm_ * tk_ * oh_item          # one-hot blocks (double-buffered)
                + 2 * tk_ * emsize * w_item      # weight blocks (double-buffered)
                + 2 * tm_ * emsize * out_item    # output blocks (double-buffered)
                + tm_ * emsize * 4)              # f32 accumulator

    while vmem_need(tm_eff, tk) > budget:
        if tk > 128 and depth_pad % (tk // 2) == 0:
            tk //= 2
        elif tm_eff > 8:
            tm_eff = max(8, tm_eff // 2)
        else:
            break

    grid_m = pl.cdiv(M, tm_eff)
    grid_k = depth_pad // tk
    need = vmem_need(tm_eff, tk)
    vmem_limit = _vmem_limit(need, vmem_cap)

    cost = pl.CostEstimate(
        flops=2 * M * depth_pad * emsize,
        transcendentals=M if max_norm is not None else 0,
        bytes_accessed=(M * depth_pad * oh_item
                        + grid_m * depth_pad * emsize * w_item
                        + M * emsize * out_item),
    )

    if grid_k == 1:
        kernel = functools.partial(_matmul_kernel_single_k,
                                   max_norm=max_norm, norm_type=norm_type)
        grid_spec = pltpu.PrefetchScalarGridSpec(
            num_scalar_prefetch=0,
            grid=(grid_m,),
            in_specs=[
                pl.BlockSpec((tm_eff, depth_pad), lambda i: (i, 0)),
                pl.BlockSpec((depth_pad, emsize), lambda i: (0, 0)),
            ],
            out_specs=pl.BlockSpec((tm_eff, emsize), lambda i: (i, 0)),
            scratch_shapes=[],
        )
        dims = ("parallel",)
    else:
        kernel = functools.partial(_matmul_kernel,
                                   max_norm=max_norm, norm_type=norm_type)
        grid_spec = pltpu.PrefetchScalarGridSpec(
            num_scalar_prefetch=0,
            grid=(grid_m, grid_k),
            in_specs=[
                pl.BlockSpec((tm_eff, tk), lambda i, k: (i, k)),
                pl.BlockSpec((tk, emsize), lambda i, k: (k, 0)),
            ],
            out_specs=pl.BlockSpec((tm_eff, emsize), lambda i, k: (i, 0)),
            scratch_shapes=[pltpu.VMEM((tm_eff, emsize), jnp.float32)],
        )
        dims = ("parallel", "arbitrary")

    return pl.pallas_call(
        kernel,
        out_shape=jax.ShapeDtypeStruct((M, emsize), jnp.float32),
        grid_spec=grid_spec,
        compiler_params=pltpu.CompilerParams(
            dimension_semantics=dims,
            vmem_limit_bytes=vmem_limit,
        ),
        cost_estimate=cost,
    )(one_hot_flat, weight)


# ---------------------------------------------------------------------------
# Path 2: integer-index input  ->  double-buffered DMA row gather from HBM.
# ---------------------------------------------------------------------------
def _gather_kernel(ids_ref, w_hbm, out_ref, buf, sem, *,
                   rows_per_tile, max_norm, norm_type):
    i = pl.program_id(0)
    n = pl.num_programs(0)
    slot = i & 1

    def issue(tile, s):
        base = tile * rows_per_tile

        @pl.loop(0, rows_per_tile)
        def _issue(r):
            idx = ids_ref[base + r]
            pltpu.make_async_copy(w_hbm.at[idx], buf.at[s, r], sem.at[s]).start()

    # Prime the pipeline on the first step, then keep the next tile in flight.
    @pl.when(i == 0)
    def _prime():
        issue(0, 0)

    @pl.when(i + 1 < n)
    def _prefetch():
        issue(i + 1, 1 - slot)

    # Wait for this tile's rows (all copies have identical byte counts, so
    # rows_per_tile waits on the per-slot semaphore drain exactly the issued copies).
    @pl.loop(0, rows_per_tile)
    def _wait(r):
        pltpu.make_async_copy(w_hbm.at[0], buf.at[slot, r], sem.at[slot]).wait()

    rows = buf[slot].astype(jnp.float32)
    out_ref[...] = _apply_max_norm(rows, max_norm, norm_type).astype(out_ref.dtype)


def _index_gather(ids_flat, weight, max_norm, norm_type, tg):
    depth, emsize = weight.shape
    M = ids_flat.shape[0]
    w_item = jnp.dtype(weight.dtype).itemsize

    rows_per_tile = min(tg, _round_up(M, 8))

    vmem_cap = _vmem_capacity_bytes()
    budget = vmem_cap - (8 << 20)

    def vmem_need(rows):
        return 2 * rows * emsize * w_item + 2 * rows * emsize * 4

    while vmem_need(rows_per_tile) > budget and rows_per_tile > 8:
        rows_per_tile = max(8, _round_up(rows_per_tile // 2, 8))

    M_pad = _round_up(M, rows_per_tile)
    if M_pad != M:
        # Only the tiny 1-D index vector is ever padded (never the big operands).
        ids_flat = jnp.pad(ids_flat, (0, M_pad - M))
    n_tiles = M_pad // rows_per_tile
    vmem_limit = _vmem_limit(vmem_need(rows_per_tile), vmem_cap)

    kernel = functools.partial(_gather_kernel, rows_per_tile=rows_per_tile,
                               max_norm=max_norm, norm_type=norm_type)

    # TODO(synk): for very large M the whole id vector is scalar-prefetched to
    # SMEM; chunk ids across multiple pallas_calls if that ever exceeds SMEM.
    out = pl.pallas_call(
        kernel,
        out_shape=jax.ShapeDtypeStruct((M_pad, emsize), jnp.float32),
        grid_spec=pltpu.PrefetchScalarGridSpec(
            num_scalar_prefetch=1,
            grid=(n_tiles,),
            in_specs=[pl.BlockSpec(memory_space=pl.ANY)],   # weight stays in HBM
            out_specs=pl.BlockSpec((rows_per_tile, emsize), lambda i, ids: (i, 0)),
            scratch_shapes=[
                pltpu.VMEM((2, rows_per_tile, emsize), weight.dtype),  # double buffer
                pltpu.SemaphoreType.DMA((2,)),
            ],
        ),
        # "arbitrary": the cross-step prefetch primes at i == 0 and relies on the
        # grid axis running sequentially on one core.
        # TODO(synk): a megacore-parallel variant needs per-core pipeline priming.
        compiler_params=pltpu.CompilerParams(
            dimension_semantics=("arbitrary",),
            vmem_limit_bytes=vmem_limit,
        ),
        cost_estimate=pl.CostEstimate(
            flops=0,
            transcendentals=M if max_norm is not None else 0,
            bytes_accessed=M_pad * emsize * (w_item + 4),
        ),
    )(ids_flat, weight)
    return out[:M]


# ---------------------------------------------------------------------------
# Public wrapper matching EmbeddingMul.forward.
# ---------------------------------------------------------------------------
def embedding_mul_forward(
    inp,
    weight,
    padding_idx=-1,
    max_norm=None,
    norm_type=2.0,
    scale_grad_by_freq=False,
    sparse=False,
    one_hot_input=True,
    *,
    tm=512,                 # row tile for the matmul path
    gather_rows=512,        # rows per tile for the gather path
    strict_one_hot=False,   # True: route one-hot input through argmax + gather
    cast_one_hot_to_bf16=True,
):
    """JAX/Pallas equivalent of EmbeddingMul.forward."""
    if padding_idx != -1:
        raise NotImplementedError(f"padding_idx must be -1, not {padding_idx}")
    if scale_grad_by_freq:
        raise NotImplementedError("scale_grad_by_freq must be False")
    if sparse:
        raise NotImplementedError("sparse must be False")

    depth, emsize = weight.shape
    emsize_orig = emsize
    # Keep the lane dimension 128-dense (zero-padded columns do not change norms).
    if emsize % 128 != 0:
        weight = jnp.pad(weight, ((0, 0), (0, _round_up(emsize, 128) - emsize)))
        emsize = weight.shape[1]

    bptt, bsize = inp.shape[0], inp.shape[1]
    M = bptt * bsize

    if one_hot_input and not strict_one_hot:
        one_hot = inp  # (bptt, bsize, depth), already one-hot
        if not jnp.issubdtype(one_hot.dtype, jnp.floating):
            one_hot = one_hot.astype(jnp.float32)      # matches `.float()` in the module
        if cast_one_hot_to_bf16 and one_hot.dtype == jnp.float32:
            # 0/1 values are exact in bf16 -> halves the dominant HBM stream.
            one_hot = one_hot.astype(jnp.bfloat16)
        oh_flat = one_hot.reshape(M, depth)
        out_flat = _one_hot_matmul(oh_flat, weight, max_norm, norm_type, tm)
    else:
        if one_hot_input:
            # strict one-hot: the matmul is semantically a gather -> recover indices.
            ids_flat = jnp.argmax(inp.reshape(M, depth), axis=-1).astype(jnp.int32)
        else:
            ids_flat = inp.reshape(M).astype(jnp.int32)
        out_flat = _index_gather(ids_flat, weight, max_norm, norm_type, gather_rows)

    out = out_flat.reshape(bptt, bsize, emsize)
    if emsize != emsize_orig:
        out = out[..., :emsize_orig]
    return out


# ---------------------------------------------------------------------------
# Self-test
# ---------------------------------------------------------------------------
if __name__ == "__main__":
    key = jax.random.PRNGKey(0)

    def reference(one_hot, weight, max_norm=None, norm_type=2.0):
        res = jnp.einsum("tbd,de->tbe", one_hot.astype(jnp.float32), weight)
        if max_norm is not None:
            norm = jnp.sum(jnp.abs(res) ** norm_type, axis=-1, keepdims=True) ** (1.0 / norm_type)
            res = jnp.where(norm > max_norm, res / norm, res)
        return res

    # ---- Case 1: aligned shapes; exercises the K-tiled accumulator (3 K-steps).
    bptt, bsize, dict_size, emsize = 8, 4, 384, 128
    k_idx, k_w = jax.random.split(jax.random.fold_in(key, 0))
    indices = jax.random.randint(k_idx, (bptt, bsize), 0, dict_size)
    weight = jax.random.normal(k_w, (dict_size, emsize), dtype=jnp.float32)
    one_hot = jax.nn.one_hot(indices, dict_size, dtype=jnp.float32)
    ref = reference(one_hot, weight)

    out = jax.block_until_ready(
        embedding_mul_forward(one_hot, weight, padding_idx=-1, one_hot_input=True))
    assert out.shape == (bptt, bsize, emsize)
    assert jnp.allclose(out, ref, atol=1e-5, rtol=1e-5)

    # max_norm epilogue (renorm rows whose 2-norm exceeds max_norm).
    out_mn = jax.block_until_ready(
        embedding_mul_forward(one_hot, weight, padding_idx=-1, max_norm=1.0))
    ref_mn = reference(one_hot, weight, max_norm=1.0)
    assert jnp.allclose(out_mn, ref_mn, atol=1e-4, rtol=1e-4)

    # Index-input path: double-buffered DMA row-gather kernel.
    out_idx = jax.block_until_ready(
        embedding_mul_forward(indices, weight, padding_idx=-1, one_hot_input=False))
    assert jnp.allclose(out_idx, ref, atol=1e-5, rtol=1e-5)

    # Strict-one-hot routing: argmax in the wrapper + gather kernel.
    out_strict = jax.block_until_ready(
        embedding_mul_forward(one_hot, weight, padding_idx=-1, strict_one_hot=True))
    assert jnp.allclose(out_strict, ref, atol=1e-5, rtol=1e-5)

    # ---- Case 2: unaligned shapes — partial M tile (M=15), padded depth
    # (200 -> 256, single-K kernel) and padded emsize (96 -> 128, sliced back).
    bptt2, bsize2, dict2, em2 = 5, 3, 200, 96
    k_idx2, k_w2 = jax.random.split(jax.random.fold_in(key, 1))
    indices2 = jax.random.randint(k_idx2, (bptt2, bsize2), 0, dict2)
    weight2 = jax.random.normal(k_w2, (dict2, em2), dtype=jnp.float32)
    one_hot2 = jax.nn.one_hot(indices2, dict2, dtype=jnp.float32)
    ref2 = reference(one_hot2, weight2)

    out2 = jax.block_until_ready(
        embedding_mul_forward(one_hot2, weight2, padding_idx=-1))
    assert out2.shape == (bptt2, bsize2, em2)
    assert jnp.allclose(out2, ref2, atol=1e-5, rtol=1e-5)

    out2_idx = jax.block_until_ready(
        embedding_mul_forward(indices2, weight2, padding_idx=-1, one_hot_input=False))
    assert jnp.allclose(out2_idx, ref2, atol=1e-5, rtol=1e-5)

    print("KERNEL_OK")
</pallas_src>

<mosaic_0001>
module attributes {stable_mosaic.version = 11 : i64} {
  func.func @_matmul_kernel(%arg0: i32, %arg1: i32, %arg2: memref<32x128xbf16, #tpu.memory_space<vmem>>, %arg3: memref<128x128xf32, #tpu.memory_space<vmem>>, %arg4: memref<32x128xf32, #tpu.memory_space<vmem>>, %arg5: memref<32x128xf32, #tpu.memory_space<vmem>>) attributes {dimension_semantics = [#tpu.dimension_semantics<parallel>, #tpu.dimension_semantics<arbitrary>], iteration_bounds = array<i64: 1, 3>, scalar_prefetch = 0 : i64, scratch_operands = 1 : i64, tpu.core_type = #tpu.core_type<tc>, window_params = [{transform_indices = @transform_0, window_bounds = array<i64: 32, 128>}, {transform_indices = @transform_1, window_bounds = array<i64: 128, 128>}, {transform_indices = @transform_2, window_bounds = array<i64: 32, 128>}]} {
    %c0_i32 = arith.constant 0 : i32
    %0 = arith.cmpi eq, %arg1, %c0_i32 : i32
    %1 = arith.extui %0 : i1 to i32
    %c0_i32_0 = arith.constant 0 : i32
    %2 = arith.cmpi ne, %1, %c0_i32_0 : i32
    scf.if %2 {
      %cst_9 = arith.constant 0.000000e+00 : f32
      %13 = vector.broadcast %cst_9 : f32 to vector<32x128xf32>
      %c0_10 = arith.constant 0 : index
      %c0_11 = arith.constant 0 : index
      %14 = vector.load %arg5[%c0_10, %c0_11] : memref<32x128xf32, #tpu.memory_space<vmem>>, vector<32x128xf32>
      tpu.vector_store %arg5[%c0_10, %c0_11], %13 {strides = array<i32>} : memref<32x128xf32, #tpu.memory_space<vmem>>, vector<32x128xf32>,
    } else {
    }
    %c0 = arith.constant 0 : index
    %c0_1 = arith.constant 0 : index
    %3 = vector.load %arg2[%c0, %c0_1] : memref<32x128xbf16, #tpu.memory_space<vmem>>, vector<32x128xbf16>
    %c0_2 = arith.constant 0 : index
    %c0_3 = arith.constant 0 : index
    %4 = vector.load %arg3[%c0_2, %c0_3] : memref<128x128xf32, #tpu.memory_space<vmem>>, vector<128x128xf32>
    %5 = arith.extf %3 : vector<32x128xbf16> to vector<32x128xf32>
    %c0_4 = arith.constant 0 : index
    %c0_5 = arith.constant 0 : index
    %6 = vector.load %arg5[%c0_4, %c0_5] : memref<32x128xf32, #tpu.memory_space<vmem>>, vector<32x128xf32>
    %cst = arith.constant dense<0.000000e+00> : vector<32x128xf32>
    %7 = tpu.matmul %5, %4, %cst {dimension_numbers = #tpu.dot_dimension_numbers<[1], [0], [0], [1], [0, 0, 1, 1], [], []>} : vector<32x128xf32>, vector<128x128xf32>, vector<32x128xf32> -> vector<32x128xf32>
    %8 = arith.addf %6, %7 : vector<32x128xf32>
    %c0_6 = arith.constant 0 : index
    %c0_7 = arith.constant 0 : index
    %9 = vector.load %arg5[%c0_6, %c0_7] : memref<32x128xf32, #tpu.memory_space<vmem>>, vector<32x128xf32>
    tpu.vector_store %arg5[%c0_6, %c0_7], %8 {strides = array<i32>} : memref<32x128xf32, #tpu.memory_space<vmem>>, vector<32x128xf32>,
    %c2_i32 = arith.constant 2 : i32
    %10 = arith.cmpi eq, %arg1, %c2_i32 : i32
    %11 = arith.extui %10 : i1 to i32
    %c0_i32_8 = arith.constant 0 : i32
    %12 = arith.cmpi ne, %11, %c0_i32_8 : i32
    scf.if %12 {
      %c0_9 = arith.constant 0 : index
      %c0_10 = arith.constant 0 : index
      %13 = vector.load %arg5[%c0_9, %c0_10] : memref<32x128xf32, #tpu.memory_space<vmem>>, vector<32x128xf32>
      %c0_11 = arith.constant 0 : index
      %c0_12 = arith.constant 0 : index
      %14 = vector.load %arg4[%c0_11, %c0_12] : memref<32x128xf32, #tpu.memory_space<vmem>>, vector<32x128xf32>
      tpu.vector_store %arg4[%c0_11, %c0_12], %13 {strides = array<i32>} : memref<32x128xf32, #tpu.memory_space<vmem>>, vector<32x128xf32>,
    } else {
    }
    return
  }
  func.func @transform_0(%arg0: i32, %arg1: i32) -> (i32, i32) {
    %c0_i32 = arith.constant 0 : i32
    return %arg0, %arg1 : i32, i32
  }
  func.func @transform_1(%arg0: i32, %arg1: i32) -> (i32, i32) {
    %c0_i32 = arith.constant 0 : i32
    %c0_i32_0 = arith.constant 0 : i32
    return %arg1, %c0_i32 : i32, i32
  }
  func.func @transform_2(%arg0: i32, %arg1: i32) -> (i32, i32) {
    %c0_i32 = arith.constant 0 : i32
    %c0_i32_0 = arith.constant 0 : i32
    return %arg0, %c0_i32 : i32, i32
  }
}

</mosaic_0001>

<llo_original>
// kernel: tpu_custom_call.1
$region0: #{tpu_custom_call.1}
  #allocation0 [shape = 'u32[]', space=smem, size = 0x4, offset = 0x4, fixed_abs, tag = 'smem constant byte address 0x4 - core index']
  #allocation1 [shape = 'u32[144,128]{1,0:T(1,128)}', space=vmem, size = 0x12000, scoped, tag = 'internal scratch']
  #allocation2 [shape = 'f32[32,128]{1,0:T(8,128)}', space=vmem, size = 0x4000, scoped, tag = 'scratch operand']
  %s0 = inlined_call_operand.hbm [shape: bf16[32,384], index: 0, kind: input, shape index: {}]
  %s1 = inlined_call_operand.hbm [shape: f32[384,128], index: 1, kind: input, shape index: {}]
  %s2 = inlined_call_operand.hbm [shape: f32[32,128], index: 2, kind: output, shape index: {}]
  %s3 = sld [smem:[#allocation0]]
  $region57: #{tpu_custom_call.1} parent=0
    _
  %s5 = ssub.s32 1, %s3
  %s6 = scalar_select 0, %s5, %s3
  $region1: #{tpu_custom_call.1} parent=0
    #allocation3 [shape = 'u8[16384]{0}', space=vmem, size = 0x4000, scoped, tag = 'input window, operand 0']
    #allocation4 [shape = 's32[2]{0}', space=sflag, size = 0x8, scoped, tag = 'scoped memory for tpu_custom_call.1']
    #allocation5 [shape = 's32[2]{0}', space=sflag, size = 0x8, scoped, tag = 'scoped memory for tpu_custom_call.1']
    #allocation6 [shape = 'u8[131072]{0}', space=vmem, size = 0x20000, scoped, tag = 'input window, operand 1']
    #allocation7 [shape = 's32[2]{0}', space=sflag, size = 0x8, scoped, tag = 'scoped memory for tpu_custom_call.1']
    #allocation8 [shape = 'u8[16384]{0}', space=vmem, size = 0x4000, scoped, tag = 'output window, operand 0, single buffered']
    %7 = vsyncpa [#allocation4], 0
    %s8 = scalar_lea.sflag [#allocation4], 1
    %9 = vsyncpa %s8, 0
    %10 = vsyncpa [#allocation7], 0
    %s11 = scalar_lea.sflag [#allocation7], 1
    %12 = vsyncpa %s11, 0
    %13 = vsyncpa [#allocation5], 0
    loop: start=0, step=1, limit=5
    $region2: #{tpu_custom_call.1} parent=1 // loop_pre_header
      _
    $region3: #{tpu_custom_call.1} parent=1 // loop_header
      %s15 = sphi 0, %s19
      %p16 = scmp.ge.s32.totalorder %s15, 5
      %s22 = sphi 0, %s34
      %s23 = sphi 0, %s30
      %s24 = sphi 0, %s22
      %s25 = sphi 0, %s23
      %s26 = sphi 0, %s24
      %s27 = sphi 0, %s25
      %s39 = sphi 0, %s41
      %s42 = sphi 0, %s39
      %s43 = sphi 0, %s42
      %s59 = sphi 0, %s43
      %s65 = sphi 0, %s67
      %s68 = sphi 0, %s65
      %s69 = sphi 0, %s68
      %s85 = sphi 0, %s69
      %s91 = sphi 0, %s93
      %s94 = sphi 0, %s91
      %s95 = sphi 0, %s94
      %s111 = sphi 0, %s95
    $region4: #{tpu_custom_call.1} parent=1 // loop_header_branch
      %18 = sbr.rel (%p16) target = $region8
    $region5: #{tpu_custom_call.1} parent=1 // loop_body
      %s20 = ssub.s32 %s15, 1
      %s21 = ssub.s32 %s15, 2
      %s28 = sadd.s32 1, %s23
      %p29 = scmp.ge.s32.totalorder %s28, 3
      %s30 = scalar_select %p29, 0, %s28
      %s31 = sadd.s32 1, %s22
      %s32 = scalar_select %p29, %s31, %s22
      %p33 = scmp.ge.s32.totalorder %s32, 1
      %s34 = scalar_select %p33, 0, %s32
      %s35 = ssub.s32 %s22, %s34
      %s36 = ssub.s32 %s23, %s30
      %s37 = sor.u32 %s35, %s36
      %p38 = scmp.eq.s32.totalorder %s37, 0
      %s40 = sadd.s32 %s39, 1
      %s41 = scalar_select %p38, %s39, %s40
      %p44 = pneg %p38
      %p45 = scmp.eq.s32.totalorder %s15, 2
      %p46 = por %p44, %p45
      %p47 = scmp.ne.s32.totalorder %s39, %s42
      %p48 = scmp.eq.s32.totalorder %s15, 0
      %p49 = por %p47, %p48
      %p50 = scmp.ne.s32.totalorder %s39, %s42
      %p51 = scmp.eq.s32.totalorder %s20, 2
      %p52 = por %p50, %p51
      %p53 = scmp.ne.s32.totalorder %s42, %s43
      %p54 = scmp.eq.s32.totalorder %s20, 0
      %p55 = por %p53, %p54
      %p56 = scmp.ne.s32.totalorder %s42, %s43
      %p57 = scmp.eq.s32.totalorder %s21, 2
      %p58 = por %p56, %p57
      %p60 = scmp.ne.s32.totalorder %s43, %s59
      %p61 = scmp.eq.s32.totalorder %s21, 0
      %p62 = por %p60, %p61
      %s63 = ssub.s32 %s23, %s30
      %p64 = scmp.eq.s32.totalorder %s63, 0
      %s66 = sadd.s32 %s65, 1
      %s67 = scalar_select %p64, %s65, %s66
      %p70 = pneg %p64
      %p71 = scmp.eq.s32.totalorder %s15, 2
      %p72 = por %p70, %p71
      %p73 = scmp.ne.s32.totalorder %s65, %s68
      %p74 = scmp.eq.s32.totalorder %s15, 0
      %p75 = por %p73, %p74
      %p76 = scmp.ne.s32.totalorder %s65, %s68
      %p77 = scmp.eq.s32.totalorder %s20, 2
      %p78 = por %p76, %p77
      %p79 = scmp.ne.s32.totalorder %s68, %s69
      %p80 = scmp.eq.s32.totalorder %s20, 0
      %p81 = por %p79, %p80
      %p82 = scmp.ne.s32.totalorder %s68, %s69
      %p83 = scmp.eq.s32.totalorder %s21, 2
      %p84 = por %p82, %p83
      %p86 = scmp.ne.s32.totalorder %s69, %s85
      %p87 = scmp.eq.s32.totalorder %s21, 0
      %p88 = por %p86, %p87
      %s89 = ssub.s32 %s22, %s34
      %p90 = scmp.eq.s32.totalorder %s89, 0
      %s92 = sadd.s32 %s91, 1
      %s93 = scalar_select %p90, %s91, %s92
      %p96 = pneg %p90
      %p97 = scmp.eq.s32.totalorder %s15, 2
      %p98 = por %p96, %p97
      %p99 = scmp.ne.s32.totalorder %s91, %s94
      %p100 = scmp.eq.s32.totalorder %s15, 0
      %p101 = por %p99, %p100
      %p102 = scmp.ne.s32.totalorder %s91, %s94
      %p103 = scmp.eq.s32.totalorder %s20, 2
      %p104 = por %p102, %p103
      %p105 = scmp.ne.s32.totalorder %s94, %s95
      %p106 = scmp.eq.s32.totalorder %s20, 0
      %p107 = por %p105, %p106
      %p108 = scmp.ne.s32.totalorder %s94, %s95
      %p109 = scmp.eq.s32.totalorder %s21, 2
      %p110 = por %p108, %p109
      %p112 = scmp.ne.s32.totalorder %s95, %s111
      %p113 = scmp.eq.s32.totalorder %s21, 0
      %p114 = por %p112, %p113
      %p115 = scmp.le.s32.totalorder 1, %s15
      %p116 = scmp.lt.s32.totalorder %s15, 4
      %p117 = pnand %p115, %p116
      %p118 = pneg %p117
      // Predicated region
      $region9: #{tpu_custom_call.1} parent=5 // pred_check
        _
      $region10: #{tpu_custom_call.1} parent=5 // pred_check_branch
        %120 = sbr.rel (%p117) target = $region12
      $region11: #{tpu_custom_call.1} parent=5 // pred_region
        %s121 = ssub.s32 %s15, 1
      $region12: #{tpu_custom_call.1} parent=5 // pred_fallthru
        _
      %p122 = scmp.lt.s32.totalorder %s15, 3
      // Predicated region
      $region13: #{tpu_custom_call.1} parent=5 // pred_check
        %p123 = pneg %p122
      $region14: #{tpu_custom_call.1} parent=5 // pred_check_branch
        %125 = sbr.rel (%p123) target = $region16
      $region15: #{tpu_custom_call.1} parent=5 // pred_region
        // Predicated region
        $region17: #{tpu_custom_call.1} parent=15 // pred_check
          %p126 = pneg %p49
        $region18: #{tpu_custom_call.1} parent=15 // pred_check_branch
          %128 = sbr.rel (%p126) target = $region20
        $region19: #{tpu_custom_call.1} parent=15 // pred_region
          %s129 = sand.u32 %s39, 1
          %s130 = scalar_lea.sflag [#allocation4], %s129
          %s131 = sand.u32 %s39, 1
          %s132 = smul.addr %s131, 16
          %s133 = scalar_lea.vmem [#allocation3], %s132
          %s134 = smul.u32 4, %s22
          %s136 = ssub.s32 256, 256
          %137 = vsyncadd %s130, %s136
          %s138 = smul.addr %s134, 3
          %s139 = sadd.s32 %s23, %s138
          %s140 = smul.addr %s139, 64
          %s141 = scalar_lea.hbm %s0, %s140
          %s142 = sshll.u32 %s133, 4
          %s143 = int_to_ptr.vmem [resolvable:$true] %s142
          %148 = dma.hbm_to_vmem [thread:$0]  %s141, 256, %s143, %s130, 192, 64, 4
        $region20: #{tpu_custom_call.1} parent=15 // pred_fallthru
          _
        // Predicated region
        $region21: #{tpu_custom_call.1} parent=15 // pred_check
          %p149 = pneg %p75
        $region22: #{tpu_custom_call.1} parent=15 // pred_check_branch
          %151 = sbr.rel (%p149) target = $region24
        $region23: #{tpu_custom_call.1} parent=15 // pred_region
          %s152 = sand.u32 %s65, 1
          %s153 = scalar_lea.sflag [#allocation7], %s152
          %s154 = sand.u32 %s65, 1
          %s155 = smul.addr %s154, 128
          %s156 = scalar_lea.vmem [#allocation6], %s155
          %s157 = smul.u32 16, %s23
          %s159 = ssub.s32 2048, 2048
          %160 = vsyncadd %s153, %s159
          %s161 = smul.addr %s157, 128
          %s162 = scalar_lea.hbm %s1, %s161
          %s163 = sshll.u32 %s156, 4
          %s164 = int_to_ptr.vmem [resolvable:$true] %s163
          %169 = dma.hbm_to_vmem [thread:$0]  %s162, 2048, %s164, %s153, 128, 128, 8
        $region24: #{tpu_custom_call.1} parent=15 // pred_fallthru
          _
      $region16: #{tpu_custom_call.1} parent=5 // pred_fallthru
        _
      %p170 = scmp.le.s32.totalorder 1, %s15
      %p171 = scmp.lt.s32.totalorder %s15, 4
      %p172 = pnand %p170, %p171
      %p173 = pneg %p172
      // Predicated region
      $region25: #{tpu_custom_call.1} parent=5 // pred_check
        _
      $region26: #{tpu_custom_call.1} parent=5 // pred_check_branch
        %175 = sbr.rel (%p172) target = $region28
      $region27: #{tpu_custom_call.1} parent=5 // pred_region
        %s176 = ssub.s32 %s15, 1
        %s177 = sand.u32 %s42, 1
        %s178 = scalar_lea.sflag [#allocation4], %s177
        %s179 = sand.u32 %s42, 1
        %s180 = smul.addr %s179, 16
        %s181 = scalar_lea.vmem [#allocation3], %s180
        // Predicated region
        $region29: #{tpu_custom_call.1} parent=27 // pred_check
          %p182 = pneg %p55
        $region30: #{tpu_custom_call.1} parent=27 // pred_check_branch
          %184 = sbr.rel (%p182) target = $region32
        $region31: #{tpu_custom_call.1} parent=27 // pred_region
          %185 = dma.done %s178, 256
        $region32: #{tpu_custom_call.1} parent=27 // pred_fallthru
          _
        %s186 = sand.u32 %s68, 1
        %s187 = scalar_lea.sflag [#allocation7], %s186
        %s188 = sand.u32 %s68, 1
        %s189 = smul.addr %s188, 128
        %s190 = scalar_lea.vmem [#allocation6], %s189
        // Predicated region
        $region33: #{tpu_custom_call.1} parent=27 // pred_check
          %p191 = pneg %p81
        $region34: #{tpu_custom_call.1} parent=27 // pred_check_branch
          %193 = sbr.rel (%p191) target = $region36
        $region35: #{tpu_custom_call.1} parent=27 // pred_region
          %194 = dma.done %s187, 2048
        $region36: #{tpu_custom_call.1} parent=27 // pred_fallthru
          _
        %s195 = sand.u32 %s42, 1
        %s196 = scalar_lea.sflag [#allocation4], %s195
        %s197 = sand.u32 %s42, 1
        %s198 = smul.addr %s197, 16
        %s199 = scalar_lea.vmem [#allocation3], %s198
        %p200 = pneg %p55
        %p201 = pneg %p52
        %s202 = sand.u32 %s68, 1
        %s203 = scalar_lea.sflag [#allocation7], %s202
        %s204 = sand.u32 %s68, 1
        %s205 = smul.addr %s204, 128
        %s206 = scalar_lea.vmem [#allocation6], %s205
        %p207 = pneg %p81
        %p208 = pneg %p78
        %p209 = pneg %p107
        %p210 = pneg %p104
        %s211 = smul.u32 4, %s24
        %s212 = smul.u32 16, %s25
        %s213 = smul.u32 4, %s24
        %p214 = scmp.eq.s32.totalorder %s25, 0
        // Predicated region
        $region37: #{tpu_custom_call.1} parent=27 // pred_check
          %p215 = pneg %p214
        $region38: #{tpu_custom_call.1} parent=27 // pred_check_branch
          %217 = sbr.rel (%p215) target = $region40
        $region39: #{tpu_custom_call.1} parent=27 // pred_region
          %218 = vst [vmem:[#allocation2] sm:$0xff] 0.0
          %219 = vst [vmem:[#allocation2 + $0x8] sm:$0xff] 0.0
          %220 = vst [vmem:[#allocation2 + $0x10] sm:$0xff] 0.0
          %221 = vst [vmem:[#allocation2 + $0x18] sm:$0xff] 0.0
        $region40: #{tpu_custom_call.1} parent=27 // pred_fallthru
          _
        %v222 = vld [vmem:[%s181] sm:$0xf]
        %v223 = vld [vmem:[%s181 + $0x4] sm:$0xf]
        %v224 = vld [vmem:[%s181 + $0x8] sm:$0xf]
        %v225 = vld [vmem:[%s181 + $0xc] sm:$0xf]
        %v226 = vld [vmem:[%s190] sm:$0xff]
        %v227 = vld [vmem:[%s190 + $0x8] sm:$0xff]
        %v228 = vld [vmem:[%s190 + $0x10] sm:$0xff]
        %v229 = vld [vmem:[%s190 + $0x18] sm:$0xff]
        %v230 = vld [vmem:[%s190 + $0x20] sm:$0xff]
        %v231 = vld [vmem:[%s190 + $0x28] sm:$0xff]
        %v232 = vld [vmem:[%s190 + $0x30] sm:$0xff]
        %v233 = vld [vmem:[%s190 + $0x38] sm:$0xff]
        %v234 = vld [vmem:[%s190 + $0x40] sm:$0xff]
        %v235 = vld [vmem:[%s190 + $0x48] sm:$0xff]
        %v236 = vld [vmem:[%s190 + $0x50] sm:$0xff]
        %v237 = vld [vmem:[%s190 + $0x58] sm:$0xff]
        %v238 = vld [vmem:[%s190 + $0x60] sm:$0xff]
        %v239 = vld [vmem:[%s190 + $0x68] sm:$0xff]
        %v240 = vld [vmem:[%s190 + $0x70] sm:$0xff]
        %v241 = vld [vmem:[%s190 + $0x78] sm:$0xff]
        %v242 = vunpack.c.l.bf16 %v222
        %v243 = vunpack.c.l.bf16 %v223
        %v244 = vunpack.c.l.bf16 %v224
        %v245 = vunpack.c.l.bf16 %v225
        %v246 = vld [vmem:[#allocation2] sm:$0xff]
        %v247 = vld [vmem:[#allocation2 + $0x8] sm:$0xff]
        %v248 = vld [vmem:[#allocation2 + $0x10] sm:$0xff]
        %v249 = vld [vmem:[#allocation2 + $0x18] sm:$0xff]
        %250 = vmatprep.subr.mxu0 0.0
        %251 = vmatpush1.msra.mxu0 %v226
        %252 = vmatprep.subr.mxu0 0.0
        %253 = vmatpush1.msra.mxu0 %v227
        %254 = vmatprep.subr.mxu0 0.0
        %255 = vmatpush1.msra.mxu0 %v228
        %256 = vmatprep.subr.mxu0 0.0
        %257 = vmatpush1.msra.mxu0 %v229
        %258 = vmatprep.subr.mxu0 0.0
        %259 = vmatpush1.msra.mxu0 %v230
        %260 = vmatprep.subr.mxu0 0.0
        %261 = vmatpush1.msra.mxu0 %v231
        %262 = vmatprep.subr.mxu0 0.0
        %263 = vmatpush1.msra.mxu0 %v232
        %264 = vmatprep.subr.mxu0 0.0
        %265 = vmatpush1.msra.mxu0 %v233
        %266 = vmatprep.subr.mxu0 0.0
        %267 = vmatpush1.msra.mxu0 %v234
        %268 = vmatprep.subr.mxu0 0.0
        %269 = vmatpush1.msra.mxu0 %v235
        %270 = vmatprep.subr.mxu0 0.0
        %271 = vmatpush1.msra.mxu0 %v236
        %272 = vmatprep.subr.mxu0 0.0
        %273 = vmatpush1.msra.mxu0 %v237
        %274 = vmatprep.subr.mxu0 0.0
        %275 = vmatpush1.msra.mxu0 %v238
        %276 = vmatprep.subr.mxu0 0.0
        %277 = vmatpush1.msra.mxu0 %v239
        %278 = vmatprep.subr.mxu0 0.0
        %279 = vmatpush1.msra.mxu0 %v240
        %280 = vmatprep.subr.mxu0 0.0
        %281 = vmatpush1.msra.mxu0 %v241
        %282 = vmatprep.subr.mxu0 0.0
        %283 = vmatpush1.msra.mxu0 0.0
        %284 = vmatprep.subr.mxu0 0.0
        %285 = vmatpush1.msra.mxu0 0.0
        %286 = vmatprep.subr.mxu0 0.0
        %287 = vmatpush1.msra.mxu0 0.0
        %288 = vmatprep.subr.mxu0 0.0
        %289 = vmatpush1.msra.mxu0 0.0
        %290 = vmatprep.subr.mxu0 0.0
        %291 = vmatpush1.msra.mxu0 0.0
        %292 = vmatprep.subr.mxu0 0.0
        %293 = vmatpush1.msra.mxu0 0.0
        %294 = vmatprep.subr.mxu0 0.0
        %295 = vmatpush1.msra.mxu0 0.0
        %296 = vmatprep.subr.mxu0 0.0
        %297 = vmatpush1.msra.mxu0 0.0
        %298 = vmatprep.subr.mxu0 0.0
        %299 = vmatpush1.msra.mxu0 0.0
        %300 = vmatprep.subr.mxu0 0.0
        %301 = vmatpush1.msra.mxu0 0.0
        %302 = vmatprep.subr.mxu0 0.0
        %303 = vmatpush1.msra.mxu0 0.0
        %304 = vmatprep.subr.mxu0 0.0
        %305 = vmatpush1.msra.mxu0 0.0
        %306 = vmatprep.subr.mxu0 0.0
        %307 = vmatpush1.msra.mxu0 0.0
        %308 = vmatprep.subr.mxu0 0.0
        %309 = vmatpush1.msra.mxu0 0.0
        %310 = vmatprep.subr.mxu0 0.0
        %311 = vmatpush1.msra.mxu0 0.0
        %312 = vmatprep.subr.mxu0 0.0
        %313 = vmatpush1.msra.mxu0 0.0
        %314 = vmatprep.mubr.f32.mxu0 0.0
        %315 = vmatmul.mubr.f32.gmra.mrb[0].mxu0 %v242
        %v316 = vpop.f32.mrb[0].mxu0
        %v317 = vadd.f32 0.0, %v316
        %v318 = vpop.f32.mrb[0].mxu0
        %319 = vmatprep.mubr.f32.mxu0 0.0
        %320 = vmatmul.mubr.f32.gmra.mrb[0].mxu0 %v243
        %v321 = vpop.f32.mrb[0].mxu0
        %v322 = vadd.f32 0.0, %v321
        %v323 = vpop.f32.mrb[0].mxu0
        %324 = vmatprep.mubr.f32.mxu0 0.0
        %325 = vmatmul.mubr.f32.gmra.mrb[0].mxu0 %v244
        %v326 = vpop.f32.mrb[0].mxu0
        %v327 = vadd.f32 0.0, %v326
        %v328 = vpop.f32.mrb[0].mxu0
        %329 = vmatprep.mubr.f32.mxu0 0.0
        %330 = vmatmul.mubr.f32.gmra.mrb[0].mxu0 %v245
        %v331 = vpop.f32.mrb[0].mxu0
        %v332 = vadd.f32 0.0, %v331
        %v333 = vpop.f32.mrb[0].mxu0
        %334 = vdwg.mxu0
        %v335 = vadd.f32 %v246, %v317
        %v336 = vadd.f32 %v247, %v322
        %v337 = vadd.f32 %v248, %v327
        %v338 = vadd.f32 %v249, %v332
        %339 = vst [vmem:[#allocation2] sm:$0xff] %v335
        %340 = vst [vmem:[#allocation2 + $0x8] sm:$0xff] %v336
        %341 = vst [vmem:[#allocation2 + $0x10] sm:$0xff] %v337
        %342 = vst [vmem:[#allocation2 + $0x18] sm:$0xff] %v338
        %p343 = scmp.eq.s32.totalorder %s25, 2
        // Predicated region
        $region41: #{tpu_custom_call.1} parent=27 // pred_check
          %p344 = pneg %p343
        $region42: #{tpu_custom_call.1} parent=27 // pred_check_branch
          %346 = sbr.rel (%p344) target = $region44
        $region43: #{tpu_custom_call.1} parent=27 // pred_region
          %v347 = vld [vmem:[#allocation2] sm:$0xff]
          %v348 = vld [vmem:[#allocation2 + $0x8] sm:$0xff]
          %v349 = vld [vmem:[#allocation2 + $0x10] sm:$0xff]
          %v350 = vld [vmem:[#allocation2 + $0x18] sm:$0xff]
          %351 = vst [vmem:[#allocation8] sm:$0xff] %v347
          %352 = vst [vmem:[#allocation8 + $0x8] sm:$0xff] %v348
          %353 = vst [vmem:[#allocation8 + $0x10] sm:$0xff] %v349
          %354 = vst [vmem:[#allocation8 + $0x18] sm:$0xff] %v350
        $region44: #{tpu_custom_call.1} parent=27 // pred_fallthru
          _
        // Predicated region
        $region45: #{tpu_custom_call.1} parent=27 // pred_check
          %p355 = pneg %p104
        $region46: #{tpu_custom_call.1} parent=27 // pred_check_branch
          %357 = sbr.rel (%p355) target = $region48
        $region47: #{tpu_custom_call.1} parent=27 // pred_region
          %s358 = smul.u32 4, %s24
          %s360 = ssub.s32 512, 512
          %361 = vsyncadd [#allocation5], %s360
          %s362 = smul.addr %s358, 128
          %s363 = scalar_lea.hbm %s2, %s362
          %s364 = sshll.u32 [#allocation8], 4
          %s365 = int_to_ptr.vmem [resolvable:$true] %s364
          %370 = dma.vmem_to_hbm [thread:$0]  %s365, 512, %s363, [#allocation5], 128, 128, 8
        $region48: #{tpu_custom_call.1} parent=27 // pred_fallthru
          _
        // Predicated region
        $region49: #{tpu_custom_call.1} parent=27 // pred_check
          %p371 = pneg %p104
        $region50: #{tpu_custom_call.1} parent=27 // pred_check_branch
          %373 = sbr.rel (%p371) target = $region52
        $region51: #{tpu_custom_call.1} parent=27 // pred_region
          %374 = dma.done [#allocation5], 512
        $region52: #{tpu_custom_call.1} parent=27 // pred_fallthru
          _
      $region28: #{tpu_custom_call.1} parent=5 // pred_fallthru
        _
      %p375 = scmp.le.s32.totalorder 2, %s15
      // Predicated region
      $region53: #{tpu_custom_call.1} parent=5 // pred_check
        %p376 = pneg %p375
      $region54: #{tpu_custom_call.1} parent=5 // pred_check_branch
        %378 = sbr.rel (%p376) target = $region56
      $region55: #{tpu_custom_call.1} parent=5 // pred_region
        %s379 = ssub.s32 %s15, 2
      $region56: #{tpu_custom_call.1} parent=5 // pred_fallthru
        _
    $region6: #{tpu_custom_call.1} parent=1 // loop_footer
      %s19 = sadd.s32 1, %s15
    $region7: #{tpu_custom_call.1} parent=1 // loop_footer_branch
      %14 = sbr.rel target = $region3
    $region8: #{tpu_custom_call.1} parent=1 // loop_exit
      _
    %380 = vsyncpa [#allocation4], 1
    %s381 = scalar_lea.sflag [#allocation4], 1
    %382 = vsyncpa %s381, 1
    %383 = vsyncpa [#allocation7], 1
    %s384 = scalar_lea.sflag [#allocation7], 1
    %385 = vsyncpa %s384, 1
    %386 = vsyncpa [#allocation5], 1
    %s387 = scalar_lea.sflag [#allocation5], 1
    %388 = vsyncpa %s387, 1

</llo_original>
